<compile_context>
chip_gen: v6e
topology: v6e:2x2x1
jax: 0.10.0
libtpu: 0.0.40
codegen_flags: <defaults>
</compile_context>

<pallas_src>
import functools

import jax
import jax.numpy as jnp
import numpy as np
from jax import lax
from jax.experimental import pallas as pl
from jax.experimental.pallas import tpu as pltpu


def _ece_bin_kernel(logits_ref, labels_ref, cnt_ref, conf_ref, acc_ref, *,
                    n_total, n_bins, n_classes, tile_n):
    i = pl.program_id(0)

    # Global sample index of each lane in this tile; mask padded lanes.
    col = i * tile_n + lax.broadcasted_iota(jnp.int32, (1, tile_n), 1)
    valid = col < n_total                                     # (1, tile_n) bool

    x = logits_ref[...].astype(jnp.float32)                   # (C, tile_n)
    x = jnp.where(valid, x, 0.0)                              # keep padded lanes finite

    # confidence = max softmax prob = 1 / sum(exp(x - max)); no normalize.
    m = jnp.max(x, axis=0, keepdims=True)                     # (1, tile_n)
    denom = jnp.sum(jnp.exp(x - m), axis=0, keepdims=True)    # (1, tile_n)
    conf = 1.0 / denom                                        # exact divide (cheap)

    # prediction = first argmax of the raw logits (== argmax of softmax).
    cls = lax.broadcasted_iota(jnp.int32, x.shape, 0)         # class id per sublane row
    pred = jnp.min(jnp.where(x == m, cls, n_classes), axis=0, keepdims=True)

    lab = labels_ref[...]                                     # (1, tile_n) int32
    acc = (pred == lab).astype(jnp.float32)                   # (1, tile_n)

    # Uniform bins: bin k = (k/n_bins, (k+1)/n_bins]  ->  idx = ceil(conf*n_bins) - 1.
    bin_idx = jnp.ceil(conf * jnp.float32(n_bins)).astype(jnp.int32) - 1
    bin_idx = jnp.clip(bin_idx, 0, n_bins - 1)                # (1, tile_n)

    bins = lax.broadcasted_iota(jnp.int32, (n_bins, tile_n), 0)
    onehot = ((bins == bin_idx) & valid).astype(jnp.float32)  # (n_bins, tile_n)

    # Per-tile per-bin partial sums (one lane-reduce each); each grid step
    # owns its own output block, so the grid axis is fully parallel.
    cnt_ref[0] = jnp.sum(onehot, axis=1, keepdims=True)               # (n_bins, 1)
    conf_ref[0] = jnp.sum(onehot * conf, axis=1, keepdims=True)
    acc_ref[0] = jnp.sum(onehot * acc, axis=1, keepdims=True)


def ece_loss(logits, labels, n_bins=10, tile_n=None):
    """Pallas implementation of _ECELoss.forward. Returns shape (1,) float32."""
    N, C = logits.shape

    if tile_n is None:
        # Large lane-dense tiles; cap the double-buffered logits block at
        # ~8 MiB per buffer so it also fits v7x's 64 MiB (32 MiB scoped) VMEM.
        cap = max(128, (8 * 1024 * 1024) // (2 * C * 4))
        tile_n = min(2048, (cap // 128) * 128)
    if N <= tile_n:
        tile_n = N                      # full-extent block (always legal)
    else:
        tile_n = max(128, (tile_n // 128) * 128)

    grid_n = pl.cdiv(N, tile_n)

    # Batch-on-lanes layout: classes on sublanes, samples on lanes.
    logits_t = jnp.transpose(logits).astype(jnp.float32)      # (C, N)
    labels2d = labels.reshape(1, N).astype(jnp.int32)         # (1, N)

    kernel = functools.partial(_ece_bin_kernel, n_total=N, n_bins=n_bins,
                               n_classes=C, tile_n=tile_n)

    part_shape = jax.ShapeDtypeStruct((grid_n, n_bins, 1), jnp.float32)
    part_spec = pl.BlockSpec((1, n_bins, 1), lambda i: (i, 0, 0))

    cnt, conf_sum, acc_sum = pl.pallas_call(
        kernel,
        out_shape=(part_shape, part_shape, part_shape),
        grid_spec=pltpu.PrefetchScalarGridSpec(
            num_scalar_prefetch=0,
            grid=(grid_n,),
            in_specs=[
                pl.BlockSpec((C, tile_n), lambda i: (0, i)),   # logits.T tile
                pl.BlockSpec((1, tile_n), lambda i: (0, i)),   # labels row
            ],
            out_specs=[part_spec, part_spec, part_spec],
        ),
        compiler_params=pltpu.CompilerParams(
            dimension_semantics=("parallel",),
            vmem_limit_bytes=32 * 1024 * 1024,
        ),
    )(logits_t, labels2d)

    # Tiny final reduction (grid_n x n_bins floats) in plain JAX, per review:
    # keeps the grid axis parallel across TensorCores on v7x.
    cnt = jnp.sum(cnt[..., 0], axis=0)                        # (n_bins,)
    conf_sum = jnp.sum(conf_sum[..., 0], axis=0)
    acc_sum = jnp.sum(acc_sum[..., 0], axis=0)
    prop = cnt / jnp.float32(N)
    safe = jnp.maximum(cnt, 1.0)
    terms = jnp.where(cnt > 0.0,
                      jnp.abs(conf_sum / safe - acc_sum / safe) * prop,
                      0.0)
    return jnp.sum(terms).reshape(1)


if __name__ == "__main__":
    key = jax.random.PRNGKey(0)
    k1, k2 = jax.random.split(key)
    N, C = 16, 10
    logits = jax.random.normal(k1, (N, C), dtype=jnp.float32) * 3.0
    labels = jax.random.randint(k2, (N,), 0, C, dtype=jnp.int32)

    ece = ece_loss(logits, labels, n_bins=10)
    jax.block_until_ready(ece)

    # Pure-JAX/numpy reference mirroring the PyTorch loop.
    sm = jax.nn.softmax(logits, axis=1)
    conf = np.asarray(jnp.max(sm, axis=1))
    pred = np.asarray(jnp.argmax(sm, axis=1))
    acc = (pred == np.asarray(labels)).astype(np.float32)
    bounds = np.linspace(0.0, 1.0, 11).astype(np.float32)
    ece_ref = 0.0
    for lo, up in zip(bounds[:-1], bounds[1:]):
        inb = (conf > lo) & (conf <= up)
        prop = inb.astype(np.float32).mean()
        if prop > 0:
            ece_ref += abs(conf[inb].mean() - acc[inb].mean()) * prop
    assert abs(float(ece[0]) - float(ece_ref)) < 1e-5, (float(ece[0]), float(ece_ref))

    print("KERNEL_OK")
</pallas_src>

<mosaic_0001>
module attributes {stable_mosaic.version = 11 : i64} {
  func.func @_ece_bin_kernel(%arg0: i32, %arg1: memref<10x16xf32, #tpu.memory_space<vmem>>, %arg2: memref<1x16xi32, #tpu.memory_space<vmem>>, %arg3: memref<1x10x1xf32, #tpu.memory_space<vmem>>, %arg4: memref<1x10x1xf32, #tpu.memory_space<vmem>>, %arg5: memref<1x10x1xf32, #tpu.memory_space<vmem>>) attributes {dimension_semantics = [#tpu.dimension_semantics<parallel>], iteration_bounds = array<i64: 1>, scalar_prefetch = 0 : i64, scratch_operands = 0 : i64, tpu.core_type = #tpu.core_type<tc>, window_params = [{transform_indices = @transform_0, window_bounds = array<i64: 10, 16>}, {transform_indices = @transform_1, window_bounds = array<i64: 1, 16>}, {transform_indices = @transform_2, window_bounds = array<i64: 1, 10, 1>}, {transform_indices = @transform_3, window_bounds = array<i64: 1, 10, 1>}, {transform_indices = @transform_4, window_bounds = array<i64: 1, 10, 1>}]} {
    %c16_i32 = arith.constant 16 : i32
    %0 = arith.muli %arg0, %c16_i32 : i32
    %1 = tpu.iota {dimensions = array<i32: 1>} : vector<1x16xi32>
    %2 = vector.broadcast %0 : i32 to vector<1x16xi32>
    %3 = arith.addi %2, %1 : vector<1x16xi32>
    %c16_i32_0 = arith.constant 16 : i32
    %4 = vector.broadcast %c16_i32_0 : i32 to vector<1x16xi32>
    %5 = arith.cmpi slt, %3, %4 : vector<1x16xi32>
    %c0 = arith.constant 0 : index
    %c0_1 = arith.constant 0 : index
    %6 = vector.load %arg1[%c0, %c0_1] : memref<10x16xf32, #tpu.memory_space<vmem>>, vector<10x16xf32>
    %cst = arith.constant 0.000000e+00 : f32
    %7 = vector.shape_cast %5 : vector<1x16xi1> to vector<1x16xi1>
    %8 = vector.broadcast %7 : vector<1x16xi1> to vector<10x16xi1>
    %9 = vector.broadcast %cst : f32 to vector<10x16xf32>
    %10 = arith.select %8, %6, %9 : vector<10x16xi1>, vector<10x16xf32>
    %cst_2 = arith.constant dense<0xFF800000> : vector<16xf32>
    %11 = vector.multi_reduction <maximumf>, %10, %cst_2 [0] : vector<10x16xf32> to vector<16xf32>
    %12 = vector.shape_cast %11 : vector<16xf32> to vector<1x16xf32>
    %13 = vector.broadcast %12 : vector<1x16xf32> to vector<10x16xf32>
    %14 = arith.subf %10, %13 : vector<10x16xf32>
    %15 = math.exp %14 : vector<10x16xf32>
    %cst_3 = arith.constant dense<0.000000e+00> : vector<16xf32>
    %16 = vector.multi_reduction <add>, %15, %cst_3 [0] : vector<10x16xf32> to vector<16xf32>
    %17 = vector.shape_cast %16 : vector<16xf32> to vector<1x16xf32>
    %cst_4 = arith.constant 1.000000e+00 : f32
    %18 = vector.broadcast %cst_4 : f32 to vector<1x16xf32>
    %19 = arith.divf %18, %17 : vector<1x16xf32>
    %20 = tpu.iota {dimensions = array<i32: 0>} : vector<10x16xi32>
    %21 = vector.broadcast %12 : vector<1x16xf32> to vector<10x16xf32>
    %22 = arith.cmpf oeq, %10, %21 : vector<10x16xf32>
    %c10_i32 = arith.constant 10 : i32
    %23 = vector.broadcast %c10_i32 : i32 to vector<10x16xi32>
    %24 = arith.select %22, %20, %23 : vector<10x16xi1>, vector<10x16xi32>
    %cst_5 = arith.constant dense<2147483647> : vector<16xi32>
    %25 = vector.multi_reduction <minsi>, %24, %cst_5 [0] : vector<10x16xi32> to vector<16xi32>
    %26 = vector.shape_cast %25 : vector<16xi32> to vector<1x16xi32>
    %c0_6 = arith.constant 0 : index
    %c0_7 = arith.constant 0 : index
    %27 = vector.load %arg2[%c0_6, %c0_7] : memref<1x16xi32, #tpu.memory_space<vmem>>, vector<1x16xi32>
    %28 = arith.cmpi eq, %26, %27 : vector<1x16xi32>
    %29 = arith.extui %28 : vector<1x16xi1> to vector<1x16xi32>
    %30 = arith.sitofp %29 : vector<1x16xi32> to vector<1x16xf32>
    %cst_8 = arith.constant 1.000000e+01 : f32
    %31 = vector.broadcast %cst_8 : f32 to vector<1x16xf32>
    %32 = arith.mulf %19, %31 : vector<1x16xf32>
    %33 = math.ceil %32 : vector<1x16xf32>
    %34 = arith.fptosi %33 : vector<1x16xf32> to vector<1x16xi32>
    %c1_i32 = arith.constant 1 : i32
    %35 = vector.broadcast %c1_i32 : i32 to vector<1x16xi32>
    %36 = arith.subi %34, %35 : vector<1x16xi32>
    %c0_i32 = arith.constant 0 : i32
    %c9_i32 = arith.constant 9 : i32
    %37 = vector.broadcast %c0_i32 : i32 to vector<1x16xi32>
    %38 = arith.maxsi %37, %36 : vector<1x16xi32>
    %39 = vector.broadcast %c9_i32 : i32 to vector<1x16xi32>
    %40 = arith.minsi %39, %38 : vector<1x16xi32>
    %41 = tpu.iota {dimensions = array<i32: 0>} : vector<10x16xi32>
    %42 = vector.broadcast %40 : vector<1x16xi32> to vector<10x16xi32>
    %43 = arith.cmpi eq, %41, %42 : vector<10x16xi32>
    %44 = vector.broadcast %5 : vector<1x16xi1> to vector<10x16xi1>
    %45 = arith.andi %43, %44 : vector<10x16xi1>
    %46 = arith.extui %45 : vector<10x16xi1> to vector<10x16xi32>
    %47 = arith.sitofp %46 : vector<10x16xi32> to vector<10x16xf32>
    %cst_9 = arith.constant dense<0.000000e+00> : vector<10xf32>
    %48 = vector.multi_reduction <add>, %47, %cst_9 [1] : vector<10x16xf32> to vector<10xf32>
    %49 = vector.shape_cast %48 : vector<10xf32> to vector<10x1xf32>
    %c0_10 = arith.constant 0 : index
    %c0_11 = arith.constant 0 : index
    %c0_12 = arith.constant 0 : index
    %50 = vector.load %arg3[%c0_10, %c0_11, %c0_12] : memref<1x10x1xf32, #tpu.memory_space<vmem>>, vector<1x10x1xf32>
    %51 = vector.shape_cast %50 : vector<1x10x1xf32> to vector<10x1xf32>
    %52 = vector.shape_cast %49 : vector<10x1xf32> to vector<1x10x1xf32>
    tpu.vector_store %arg3[%c0_10, %c0_11, %c0_12], %52 {strides = array<i32>} : memref<1x10x1xf32, #tpu.memory_space<vmem>>, vector<1x10x1xf32>,
    %53 = vector.broadcast %19 : vector<1x16xf32> to vector<10x16xf32>
    %54 = arith.mulf %47, %53 : vector<10x16xf32>
    %cst_13 = arith.constant dense<0.000000e+00> : vector<10xf32>
    %55 = vector.multi_reduction <add>, %54, %cst_13 [1] : vector<10x16xf32> to vector<10xf32>
    %56 = vector.shape_cast %55 : vector<10xf32> to vector<10x1xf32>
    %c0_14 = arith.constant 0 : index
    %c0_15 = arith.constant 0 : index
    %c0_16 = arith.constant 0 : index
    %57 = vector.load %arg4[%c0_14, %c0_15, %c0_16] : memref<1x10x1xf32, #tpu.memory_space<vmem>>, vector<1x10x1xf32>
    %58 = vector.shape_cast %57 : vector<1x10x1xf32> to vector<10x1xf32>
    %59 = vector.shape_cast %56 : vector<10x1xf32> to vector<1x10x1xf32>
    tpu.vector_store %arg4[%c0_14, %c0_15, %c0_16], %59 {strides = array<i32>} : memref<1x10x1xf32, #tpu.memory_space<vmem>>, vector<1x10x1xf32>,
    %60 = vector.broadcast %30 : vector<1x16xf32> to vector<10x16xf32>
    %61 = arith.mulf %47, %60 : vector<10x16xf32>
    %cst_17 = arith.constant dense<0.000000e+00> : vector<10xf32>
    %62 = vector.multi_reduction <add>, %61, %cst_17 [1] : vector<10x16xf32> to vector<10xf32>
    %63 = vector.shape_cast %62 : vector<10xf32> to vector<10x1xf32>
    %c0_18 = arith.constant 0 : index
    %c0_19 = arith.constant 0 : index
    %c0_20 = arith.constant 0 : index
    %64 = vector.load %arg5[%c0_18, %c0_19, %c0_20] : memref<1x10x1xf32, #tpu.memory_space<vmem>>, vector<1x10x1xf32>
    %65 = vector.shape_cast %64 : vector<1x10x1xf32> to vector<10x1xf32>
    %66 = vector.shape_cast %63 : vector<10x1xf32> to vector<1x10x1xf32>
    tpu.vector_store %arg5[%c0_18, %c0_19, %c0_20], %66 {strides = array<i32>} : memref<1x10x1xf32, #tpu.memory_space<vmem>>, vector<1x10x1xf32>,
    return
  }
  func.func @transform_0(%arg0: i32) -> (i32, i32) {
    %c0_i32 = arith.constant 0 : i32
    %c0_i32_0 = arith.constant 0 : i32
    return %c0_i32, %arg0 : i32, i32
  }
  func.func @transform_1(%arg0: i32) -> (i32, i32) {
    %c0_i32 = arith.constant 0 : i32
    %c0_i32_0 = arith.constant 0 : i32
    return %c0_i32, %arg0 : i32, i32
  }
  func.func @transform_2(%arg0: i32) -> (i32, i32, i32) {
    %c0_i32 = arith.constant 0 : i32
    %c0_i32_0 = arith.constant 0 : i32
    %c0_i32_1 = arith.constant 0 : i32
    return %arg0, %c0_i32, %c0_i32_0 : i32, i32, i32
  }
  func.func @transform_3(%arg0: i32) -> (i32, i32, i32) {
    %c0_i32 = arith.constant 0 : i32
    %c0_i32_0 = arith.constant 0 : i32
    %c0_i32_1 = arith.constant 0 : i32
    return %arg0, %c0_i32, %c0_i32_0 : i32, i32, i32
  }
  func.func @transform_4(%arg0: i32) -> (i32, i32, i32) {
    %c0_i32 = arith.constant 0 : i32
    %c0_i32_0 = arith.constant 0 : i32
    %c0_i32_1 = arith.constant 0 : i32
    return %arg0, %c0_i32, %c0_i32_0 : i32, i32, i32
  }
}

</mosaic_0001>

<llo_original>
// kernel: tpu_custom_call.1
$region0: #{tpu_custom_call.1}
  #allocation0 [shape = 'u32[]', space=smem, size = 0x4, offset = 0x4, fixed_abs, tag = 'smem constant byte address 0x4 - core index']
  #allocation1 [shape = 'u32[144,128]{1,0:T(1,128)}', space=vmem, size = 0x12000, scoped, tag = 'internal scratch']
  %s0 = inlined_call_operand.hbm [shape: f32[10,16], index: 0, kind: input, shape index: {}]
  %s1 = inlined_call_operand.vmem [shape: s32[1,16], index: 1, kind: input, shape index: {}]
  %s2 = inlined_call_operand.vmem [shape: f32[1,10,1], index: 2, kind: output, shape index: {0}]
  %s3 = inlined_call_operand.vmem [shape: f32[1,10,1], index: 3, kind: output, shape index: {1}]
  %s4 = inlined_call_operand.vmem [shape: f32[1,10,1], index: 4, kind: output, shape index: {2}]
  %5 = xla_tuple %s2, %s3, %s4
  %s6 = sld [smem:[#allocation0]]
  $region38: #{tpu_custom_call.1} parent=0
    _
  %s8 = ssub.s32 1, %s6
  %s9 = scalar_select 0, %s8, %s6
  $region1: #{tpu_custom_call.1} parent=0
    #allocation2 [shape = 'u8[8192]{0}', space=vmem, size = 0x2000, scoped, tag = 'input window, operand 0, single buffered']
    #allocation3 [shape = 's32[1]{0}', space=sflag, size = 0x4, scoped, tag = 'scoped memory for tpu_custom_call.1']
    %10 = vsyncpa [#allocation3], 0
    // Predicated region
    $region2: #{tpu_custom_call.1} parent=1 // pred_check
      _
    $region3: #{tpu_custom_call.1} parent=1 // pred_check_branch
      %12 = sbr.rel (0) target = $region5
    $region4: #{tpu_custom_call.1} parent=1 // pred_region
      %s14 = ssub.s32 256, 256
      %15 = vsyncadd [#allocation3], %s14
      %s16 = sshll.u32 [#allocation2], 4
      %s17 = int_to_ptr.vmem [resolvable:$true] %s16
      %22 = dma.hbm_to_vmem [thread:$0]  %s0, 256, %s17, [#allocation3], 128, 128, 8
    $region5: #{tpu_custom_call.1} parent=1 // pred_fallthru
      _
    // Predicated region
    $region6: #{tpu_custom_call.1} parent=1 // pred_check
      _
    $region7: #{tpu_custom_call.1} parent=1 // pred_check_branch
      %24 = sbr.rel (0) target = $region9
    $region8: #{tpu_custom_call.1} parent=1 // pred_region
      _
    $region9: #{tpu_custom_call.1} parent=1 // pred_fallthru
      _
    // Predicated region
    $region10: #{tpu_custom_call.1} parent=1 // pred_check
      _
    $region11: #{tpu_custom_call.1} parent=1 // pred_check_branch
      %26 = sbr.rel (0) target = $region13
    $region12: #{tpu_custom_call.1} parent=1 // pred_region
      %27 = dma.done [#allocation3], 256
    $region13: #{tpu_custom_call.1} parent=1 // pred_fallthru
      _
    %s28 = smul.u32 0, 16
    %v29 = vlaneseq
    %v30 = vand.u32 %v29, 127
    %v31 = vstv %s28
    %v32 = vadd.s32 %v31, %v30
    %vm33 = vcmp.lt.s32.totalorder %v32, 16
    %v34 = vld [vmem:[#allocation2] sm:$0xff]
    %v35 = vld [vmem:[#allocation2 + $0x8] sm:$0x3]
    %v36 = vsel %vm33, 1, 0
    %vm37 = vcmp.eq.s32.totalorder %v36, 1
    %v38 = vsel %vm37, %v34, 0.0
    %v39 = vsel %vm37, %v35, 0.0
    %vm40 = vcmask 130048
    %v41 = vsel %vm40, %v38, -inf
    %vm42 = vcmask 123904
    %v43 = vsel %vm42, %v39, -inf
    %v44 = vmax.f32 %v41, %v43
    %v45 = vrot.slane %v44, 4
    %v46 = vmax.f32 %v44, %v45
    %v47 = vrot.slane %v46, 2
    %v48 = vmax.f32 %v46, %v47
    %v49 = vrot.slane %v48, 1
    %v50 = vmax.f32 %v48, %v49
    %v51 = vsub.f32 %v38, %v50
    %v52 = vsub.f32 %v39, %v50
    %v53 = vmul.f32 %v51, 1.442695
    %v54 = vpow.pop %v53
    %v55 = vmul.f32 %v52, 1.442695
    %v56 = vpow.pop %v55
    %v57 = vsel %vm40, %v54, 0.0
    %v58 = vsel %vm42, %v56, 0.0
    %v59 = vadd.f32 %v57, %v58
    %v60 = vrot.slane %v59, 4
    %v61 = vadd.f32 %v59, %v60
    %v62 = vrot.slane %v61, 2
    %v63 = vadd.f32 %v61, %v62
    %v64 = vrot.slane %v63, 1
    %v65 = vadd.f32 %v63, %v64
    %v66 = vrcp.pop %v65
    %v67 = vmul.f32 1.0, %v66
    %v68 = vlaneseq
    %v69 = vshrl.u32 %v68, 7
    %v70 = vadd.s32 %v69, 8
    %vm71 = vcmp.eq.f32.partialorder %v38, %v50
    %vm72 = vcmp.eq.f32.partialorder %v39, %v50
    %v73 = vsel %vm71, %v69, 10
    %v74 = vsel %vm72, %v70, 10
    %v75 = vsel %vm40, %v73, 2147483647
    %v76 = vsel %vm42, %v74, 2147483647
    %vm77 = vcmp.lt.s32.totalorder %v75, %v76
    %v78 = vsel %vm77, %v75, %v76
    %v79 = vrot.slane %v78, 4
    %vm80 = vcmp.lt.s32.totalorder %v78, %v79
    %v81 = vsel %vm80, %v78, %v79
    %v82 = vrot.slane %v81, 2
    %vm83 = vcmp.lt.s32.totalorder %v81, %v82
    %v84 = vsel %vm83, %v81, %v82
    %v85 = vrot.slane %v84, 1
    %vm86 = vcmp.lt.s32.totalorder %v84, %v85
    %v87 = vsel %vm86, %v84, %v85
    %v88 = vld [vmem:[%s1] sm:$0x1]
    %vm89 = vcmp.eq.s32.totalorder %v87, %v88
    %v90 = vsel %vm89, 1, 0
    %v91 = vcvt.s32.f32 %v90
    %v92 = vmul.f32 %v67, 10.0
    %v93 = vceil.f32 %v92
    %v94 = vcvt.f32.s32.to.zero.pseudo %v93
    %v95 = vsub.s32 %v94, 1
    %vm96 = vcmp.gt.s32.totalorder %v95, 0
    %v97 = vsel %vm96, %v95, 0
    %vm98 = vcmp.lt.s32.totalorder %v97, 9
    %v99 = vsel %vm98, %v97, 9
    %vm100 = vcmp.eq.s32.totalorder %v69, %v99
    %vm101 = vcmp.eq.s32.totalorder %v70, %v99
    %vm102 = vmand %vm100, %vm37
    %vm103 = vmand %vm101, %vm37
    %v104 = vsel %vm102, 1, 0
    %v105 = vsel %vm103, 1, 0
    %v106 = vcvt.s32.f32 %v104
    %v107 = vcvt.s32.f32 %v105
    %v108 = vsel %vm40, %v106, 0.0
    %109 = vadd.xlane.f32.xlu0 %v108
    %v110 = vpop.xlane.xlu0 %109
    %v111 = vsel %vm42, %v107, 0.0
    %112 = vadd.xlane.f32.xlu0 %v111
    %v113 = vpop.xlane.xlu0 %112
    %vm114 = vcmask 7168
    %115 = vst.msk [vmem:[%s2] sm:$0xff] %vm114, %v110
    %vm116 = vcmask 1024
    %117 = vst.msk [vmem:[%s2 + $0x8] sm:$0x3] %vm116, %v113
    %v118 = vmul.f32 %v106, %v67
    %v119 = vmul.f32 %v107, %v67
    %v120 = vsel %vm40, %v118, 0.0
    %121 = vadd.xlane.f32.xlu0 %v120
    %v122 = vpop.xlane.xlu0 %121
    %v123 = vsel %vm42, %v119, 0.0
    %124 = vadd.xlane.f32.xlu0 %v123
    %v125 = vpop.xlane.xlu0 %124
    %126 = vst.msk [vmem:[%s3] sm:$0xff] %vm114, %v122
    %127 = vst.msk [vmem:[%s3 + $0x8] sm:$0x3] %vm116, %v125
    %v128 = vlaneseq
    %v129 = vshrl.u32 %v128, 7
    %v130 = vsub.s32 0, %v129
    %v131 = vrot.slane %v91, %v130
    %v132 = vmul.f32 %v106, %v131
    %v133 = vmul.f32 %v107, %v131
    %v134 = vsel %vm40, %v132, 0.0
    %135 = vadd.xlane.f32.xlu0 %v134
    %v136 = vpop.xlane.xlu0 %135
    %v137 = vsel %vm42, %v133, 0.0
    %138 = vadd.xlane.f32.xlu0 %v137
    %v139 = vpop.xlane.xlu0 %138
    %140 = vst.msk [vmem:[%s4] sm:$0xff] %vm114, %v136
    %141 = vst.msk [vmem:[%s4 + $0x8] sm:$0x3] %vm116, %v139
    // Predicated region
    $region14: #{tpu_custom_call.1} parent=1 // pred_check
      _
    $region15: #{tpu_custom_call.1} parent=1 // pred_check_branch
      %143 = sbr.rel (0) target = $region17
    $region16: #{tpu_custom_call.1} parent=1 // pred_region
      _
    $region17: #{tpu_custom_call.1} parent=1 // pred_fallthru
      _
    // Predicated region
    $region18: #{tpu_custom_call.1} parent=1 // pred_check
      _
    $region19: #{tpu_custom_call.1} parent=1 // pred_check_branch
      %145 = sbr.rel (0) target = $region21
    $region20: #{tpu_custom_call.1} parent=1 // pred_region
      _
    $region21: #{tpu_custom_call.1} parent=1 // pred_fallthru
      _
    // Predicated region
    $region22: #{tpu_custom_call.1} parent=1 // pred_check
      _
    $region23: #{tpu_custom_call.1} parent=1 // pred_check_branch
      %147 = sbr.rel (0) target = $region25
    $region24: #{tpu_custom_call.1} parent=1 // pred_region
      _
    $region25: #{tpu_custom_call.1} parent=1 // pred_fallthru
      _
    // Predicated region
    $region26: #{tpu_custom_call.1} parent=1 // pred_check
      _
    $region27: #{tpu_custom_call.1} parent=1 // pred_check_branch
      %149 = sbr.rel (0) target = $region29
    $region28: #{tpu_custom_call.1} parent=1 // pred_region
      _
    $region29: #{tpu_custom_call.1} parent=1 // pred_fallthru
      _
    // Predicated region
    $region30: #{tpu_custom_call.1} parent=1 // pred_check
      _
    $region31: #{tpu_custom_call.1} parent=1 // pred_check_branch
      %151 = sbr.rel (0) target = $region33
    $region32: #{tpu_custom_call.1} parent=1 // pred_region
      _
    $region33: #{tpu_custom_call.1} parent=1 // pred_fallthru
      _
    // Predicated region
    $region34: #{tpu_custom_call.1} parent=1 // pred_check
      _
    $region35: #{tpu_custom_call.1} parent=1 // pred_check_branch
      %153 = sbr.rel (0) target = $region37
    $region36: #{tpu_custom_call.1} parent=1 // pred_region
      _
    $region37: #{tpu_custom_call.1} parent=1 // pred_fallthru
      _
    %154 = vsyncpa [#allocation3], 1

</llo_original>
